<compile_context>
chip_gen: v7x
topology: tpu7x:2x2x1
jax: 0.10.0
libtpu: 0.0.40
codegen_flags: <defaults>
</compile_context>

<pallas_src>
import jax
import jax.numpy as jnp
from jax.experimental import pallas as pl
from jax.experimental.pallas import tpu as pltpu


def gru_recurrence_kernel(gi_ref, w_hh_ref, b_hn_ref, h0_ref,
                          out_ref, hn_ref, h_scratch):
    """One grid step runs Ts timesteps; hidden state carried in VMEM scratch."""
    H = h0_ref.shape[1]
    Ts = out_ref.shape[0]

    @pl.when(pl.program_id(0) == 0)
    def _():
        h_scratch[...] = h0_ref[...]

    # Loop-invariant loads hoisted out of the time loop.
    w_hh = w_hh_ref[...]          # (H, 3H)  fused r|z|n recurrent weights
    b_hn = b_hn_ref[...]          # (1, H)   f32 (multiplied by r -> stays inside)

    def step(t, h):
        # h: (B, H) f32 carried hidden state.
        gi_t = gi_ref[t]          # (B, 3H)  single lane-dense load per step
        # ONE fused MXU call per timestep (f32 accumulation).
        gh = jnp.dot(h.astype(w_hh.dtype), w_hh,
                     preferred_element_type=jnp.float32)      # (B, 3H) f32
        r = jax.nn.sigmoid(gi_t[:, 0:H] + gh[:, 0:H])
        z = jax.nn.sigmoid(gi_t[:, H:2 * H] + gh[:, H:2 * H])
        n = jnp.tanh(gi_t[:, 2 * H:3 * H] + r * (gh[:, 2 * H:3 * H] + b_hn))
        h_new = (1.0 - z) * n + z * h
        out_ref[t] = h_new.astype(out_ref.dtype)
        return h_new

    h_last = jax.lax.fori_loop(0, Ts, step, h_scratch[...], unroll=4)
    h_scratch[...] = h_last                       # carry to next sequence tile
    hn_ref[0] = h_last.astype(hn_ref.dtype)       # resident output, HBM write once


def encoder_forward(x, params, hidden=None, *, seq_tile=64,
                    matmul_dtype=jnp.float32):
    """Pallas equivalent of Encoder.forward (unidirectional, 1 layer).

    x:       (S, B, I) float32 (dense, already-padded sequence)
    returns: output (S, B, H) f32, hidden (1, B, H) f32
    """
    S, B, I = x.shape
    H = params["w_hh_t"].shape[0]
    out_dtype = jnp.float32
    if hidden is None:
        hidden = jnp.zeros((1, B, H), out_dtype)
    h0 = hidden[0].astype(jnp.float32)

    w_ih_t = params["w_ih_t"].astype(matmul_dtype)       # (I, 3H) == weight_ih_l0.T
    w_hh_t = params["w_hh_t"].astype(matmul_dtype)       # (H, 3H) == weight_hh_l0.T
    b_ih = params["b_ih"].reshape(3 * H).astype(jnp.float32)
    b_hh = params["b_hh"].reshape(3 * H).astype(jnp.float32)

    # ---- Hoisted, time-independent input projection: one big matmul. ----
    gi = jnp.dot(x.astype(matmul_dtype).reshape(S * B, I), w_ih_t,
                 preferred_element_type=jnp.float32).reshape(S, B, 3 * H)
    # Fold biases in one op: r/z gates absorb b_ih + b_hh, n gate absorbs only
    # b_in (b_hn is applied inside the recurrence because it is multiplied by r).
    bias_fold = jnp.concatenate([b_ih[0:2 * H] + b_hh[0:2 * H],
                                 b_ih[2 * H:3 * H]])      # (3H,)
    gi = (gi + bias_fold).astype(matmul_dtype)            # bf16 halves gi bytes
    b_hn = b_hh[2 * H:3 * H].reshape(1, H)

    # ---- Sequence tiling (largest divisor of S not exceeding seq_tile). ----
    ts = max(1, min(seq_tile, S))
    while S % ts != 0:
        ts -= 1
    num_tiles = S // ts

    # Cost estimate: fused recurrent matmul + gate math.
    flops = 2 * S * B * H * 3 * H + 15 * S * B * H
    transcendentals = 3 * S * B * H
    it_mm = jnp.dtype(matmul_dtype).itemsize
    bytes_accessed = (S * B * 3 * H * it_mm               # gi
                      + H * 3 * H * it_mm + 4 * H         # W_hh + b_hn
                      + 4 * B * H                         # h0
                      + 4 * S * B * H                     # output
                      + 4 * B * H)                        # final hidden

    # Explicit VMEM budget (double-buffered gi/out tiles + resident operands).
    vmem_need = (2 * ts * B * 3 * H * it_mm
                 + 2 * ts * B * H * 4
                 + H * 3 * H * it_mm
                 + 4 * (H + 3 * B * H))
    vmem_limit = min(max(2 * vmem_need + (1 << 20), 16 << 20), 64 << 20)

    out, h_n = pl.pallas_call(
        gru_recurrence_kernel,
        out_shape=(
            jax.ShapeDtypeStruct((S, B, H), out_dtype),
            jax.ShapeDtypeStruct((1, B, H), out_dtype),
        ),
        grid_spec=pltpu.PrefetchScalarGridSpec(
            num_scalar_prefetch=0,
            grid=(num_tiles,),
            in_specs=[
                pl.BlockSpec((ts, B, 3 * H), lambda i: (i, 0, 0)),   # gi tile
                pl.BlockSpec((H, 3 * H), lambda i: (0, 0)),          # fused W_hh (resident)
                pl.BlockSpec((1, H), lambda i: (0, 0)),              # b_hn
                pl.BlockSpec((B, H), lambda i: (0, 0)),              # h0
            ],
            out_specs=[
                pl.BlockSpec((ts, B, H), lambda i: (i, 0, 0)),       # output tile
                pl.BlockSpec((1, B, H), lambda i: (0, 0, 0)),        # final hidden
            ],
            scratch_shapes=[pltpu.VMEM((B, H), jnp.float32)],        # carried h
        ),
        compiler_params=pltpu.CompilerParams(
            dimension_semantics=("arbitrary",),    # time tiles are sequential
            vmem_limit_bytes=int(vmem_limit),
        ),
        cost_estimate=pl.CostEstimate(
            flops=flops,
            transcendentals=transcendentals,
            bytes_accessed=bytes_accessed,
        ),
    )(gi, w_hh_t, b_hn, h0)
    return out, h_n


def init_params(key, input_size, hidden_size):
    """Deterministic init matching nn.GRU parameter shapes (gate order r,z,n).

    PyTorch stores weight_ih_l0: (3H, I), weight_hh_l0: (3H, H); we keep the
    transposed layout so projections are plain x @ W^T style matmuls.
    """
    k1, k2, k3, k4 = jax.random.split(key, 4)
    bound = 1.0 / jnp.sqrt(hidden_size)
    return {
        "w_ih_t": jax.random.uniform(k1, (input_size, 3 * hidden_size),
                                     jnp.float32, -bound, bound),
        "w_hh_t": jax.random.uniform(k2, (hidden_size, 3 * hidden_size),
                                     jnp.float32, -bound, bound),
        "b_ih": jax.random.uniform(k3, (3 * hidden_size,),
                                   jnp.float32, -bound, bound),
        "b_hh": jax.random.uniform(k4, (3 * hidden_size,),
                                   jnp.float32, -bound, bound),
    }


def gru_reference(x, params, hidden=None):
    """Pure-JAX reference (lax.scan) used to validate the Pallas kernel."""
    S, B, I = x.shape
    H = params["w_hh_t"].shape[0]
    h0 = jnp.zeros((B, H), jnp.float32) if hidden is None else hidden[0]
    b_ih = params["b_ih"].reshape(3 * H)
    b_hh = params["b_hh"].reshape(3 * H)

    def step(h, x_t):
        gi = x_t @ params["w_ih_t"] + b_ih
        gh = h @ params["w_hh_t"] + b_hh
        i_r, i_z, i_n = gi[:, :H], gi[:, H:2 * H], gi[:, 2 * H:]
        h_r, h_z, h_n = gh[:, :H], gh[:, H:2 * H], gh[:, 2 * H:]
        r = jax.nn.sigmoid(i_r + h_r)
        z = jax.nn.sigmoid(i_z + h_z)
        n = jnp.tanh(i_n + r * h_n)
        h_new = (1.0 - z) * n + z * h
        return h_new, h_new

    h_last, outs = jax.lax.scan(step, h0, x)
    return outs, h_last[None]


if __name__ == "__main__":
    SEQ, BATCH, INPUT, HIDDEN = 8, 2, 16, 32

    key = jax.random.PRNGKey(0)
    k_param, k_x = jax.random.split(key)
    params = init_params(k_param, INPUT, HIDDEN)
    x = jax.random.normal(k_x, (SEQ, BATCH, INPUT), jnp.float32)

    ref_out, ref_h = gru_reference(x, params)

    # f32 MXU operands (default): matches the f32 PyTorch/lax.scan reference.
    out, h_n = encoder_forward(x, params, hidden=None, seq_tile=4)
    out = jax.block_until_ready(out)
    h_n = jax.block_until_ready(h_n)
    assert out.shape == (SEQ, BATCH, HIDDEN)
    assert h_n.shape == (1, BATCH, HIDDEN)
    assert jnp.allclose(out, ref_out, atol=1e-5, rtol=1e-5)
    assert jnp.allclose(h_n, ref_h, atol=1e-5, rtol=1e-5)

    # bf16 MXU operands (v6e/v7x fast path), f32 accumulation + f32 gate math.
    out_bf, h_bf = encoder_forward(x, params, hidden=None, seq_tile=4,
                                   matmul_dtype=jnp.bfloat16)
    out_bf = jax.block_until_ready(out_bf)
    h_bf = jax.block_until_ready(h_bf)
    assert jnp.allclose(out_bf, ref_out, atol=3e-2, rtol=0)
    assert jnp.allclose(h_bf, ref_h, atol=3e-2, rtol=0)

    print("KERNEL_OK")
</pallas_src>

<mosaic_0001>
module attributes {stable_mosaic.version = 11 : i64} {
  func.func @gru_recurrence_kernel(%arg0: i32, %arg1: memref<4x2x96xf32, #tpu.memory_space<vmem>>, %arg2: memref<32x96xf32, #tpu.memory_space<vmem>>, %arg3: memref<1x32xf32, #tpu.memory_space<vmem>>, %arg4: memref<2x32xf32, #tpu.memory_space<vmem>>, %arg5: memref<4x2x32xf32, #tpu.memory_space<vmem>>, %arg6: memref<1x2x32xf32, #tpu.memory_space<vmem>>, %arg7: memref<2x32xf32, #tpu.memory_space<vmem>>) attributes {dimension_semantics = [#tpu.dimension_semantics<arbitrary>], iteration_bounds = array<i64: 2>, scalar_prefetch = 0 : i64, scratch_operands = 1 : i64, tpu.core_type = #tpu.core_type<tc>, window_params = [{transform_indices = @transform_0, window_bounds = array<i64: 4, 2, 96>}, {pipeline_mode = #tpu.pipeline_mode<synchronous>, transform_indices = @transform_1, window_bounds = array<i64: 32, 96>}, {pipeline_mode = #tpu.pipeline_mode<synchronous>, transform_indices = @transform_2, window_bounds = array<i64: 1, 32>}, {pipeline_mode = #tpu.pipeline_mode<synchronous>, transform_indices = @transform_3, window_bounds = array<i64: 2, 32>}, {transform_indices = @transform_4, window_bounds = array<i64: 4, 2, 32>}, {pipeline_mode = #tpu.pipeline_mode<synchronous>, transform_indices = @transform_5, window_bounds = array<i64: 1, 2, 32>}]} {
    %c0_i32 = arith.constant 0 : i32
    %0 = arith.cmpi eq, %arg0, %c0_i32 : i32
    %1 = arith.extui %0 : i1 to i32
    %c0_i32_0 = arith.constant 0 : i32
    %2 = arith.cmpi ne, %1, %c0_i32_0 : i32
    scf.if %2 {
      %c0_43 = arith.constant 0 : index
      %c0_44 = arith.constant 0 : index
      %154 = vector.load %arg4[%c0_43, %c0_44] : memref<2x32xf32, #tpu.memory_space<vmem>>, vector<2x32xf32>
      %c0_45 = arith.constant 0 : index
      %c0_46 = arith.constant 0 : index
      %155 = vector.load %arg7[%c0_45, %c0_46] : memref<2x32xf32, #tpu.memory_space<vmem>>, vector<2x32xf32>
      tpu.vector_store %arg7[%c0_45, %c0_46], %154 {strides = array<i32>} : memref<2x32xf32, #tpu.memory_space<vmem>>, vector<2x32xf32>,
    } else {
    }
    %c0 = arith.constant 0 : index
    %c0_1 = arith.constant 0 : index
    %3 = vector.load %arg2[%c0, %c0_1] : memref<32x96xf32, #tpu.memory_space<vmem>>, vector<32x96xf32>
    %c0_2 = arith.constant 0 : index
    %c0_3 = arith.constant 0 : index
    %4 = vector.load %arg3[%c0_2, %c0_3] : memref<1x32xf32, #tpu.memory_space<vmem>>, vector<1x32xf32>
    %c0_4 = arith.constant 0 : index
    %c0_5 = arith.constant 0 : index
    %5 = vector.load %arg7[%c0_4, %c0_5] : memref<2x32xf32, #tpu.memory_space<vmem>>, vector<2x32xf32>
    %c0_i32_6 = arith.constant 0 : i32
    %6 = arith.index_cast %c0_i32_6 : i32 to index
    %c0_7 = arith.constant 0 : index
    %c0_8 = arith.constant 0 : index
    %7 = vector.load %arg1[%6, %c0_7, %c0_8] : memref<4x2x96xf32, #tpu.memory_space<vmem>>, vector<1x2x96xf32>
    %8 = vector.shape_cast %7 : vector<1x2x96xf32> to vector<2x96xf32>
    %cst = arith.constant dense<0.000000e+00> : vector<2x96xf32>
    %9 = tpu.matmul %5, %3, %cst {dimension_numbers = #tpu.dot_dimension_numbers<[1], [0], [0], [1], [0, 0, 1, 1], [], []>} : vector<2x32xf32>, vector<32x96xf32>, vector<2x96xf32> -> vector<2x96xf32>
    %10 = vector.extract_strided_slice %8 {offsets = [0, 0], sizes = [2, 32], strides = [1, 1]} : vector<2x96xf32> to vector<2x32xf32>
    %11 = vector.extract_strided_slice %9 {offsets = [0, 0], sizes = [2, 32], strides = [1, 1]} : vector<2x96xf32> to vector<2x32xf32>
    %12 = arith.addf %10, %11 : vector<2x32xf32>
    %13 = arith.negf %12 : vector<2x32xf32>
    %14 = math.exp %13 : vector<2x32xf32>
    %cst_9 = arith.constant 1.000000e+00 : f32
    %15 = vector.broadcast %cst_9 : f32 to vector<2x32xf32>
    %16 = arith.addf %15, %14 : vector<2x32xf32>
    %17 = arith.divf %15, %16 : vector<2x32xf32>
    %18 = vector.extract_strided_slice %8 {offsets = [0, 32], sizes = [2, 32], strides = [1, 1]} : vector<2x96xf32> to vector<2x32xf32>
    %19 = vector.extract_strided_slice %9 {offsets = [0, 32], sizes = [2, 32], strides = [1, 1]} : vector<2x96xf32> to vector<2x32xf32>
    %20 = arith.addf %18, %19 : vector<2x32xf32>
    %21 = arith.negf %20 : vector<2x32xf32>
    %22 = math.exp %21 : vector<2x32xf32>
    %cst_10 = arith.constant 1.000000e+00 : f32
    %23 = vector.broadcast %cst_10 : f32 to vector<2x32xf32>
    %24 = arith.addf %23, %22 : vector<2x32xf32>
    %25 = arith.divf %23, %24 : vector<2x32xf32>
    %26 = vector.extract_strided_slice %8 {offsets = [0, 64], sizes = [2, 32], strides = [1, 1]} : vector<2x96xf32> to vector<2x32xf32>
    %27 = vector.extract_strided_slice %9 {offsets = [0, 64], sizes = [2, 32], strides = [1, 1]} : vector<2x96xf32> to vector<2x32xf32>
    %28 = vector.broadcast %4 : vector<1x32xf32> to vector<2x32xf32>
    %29 = arith.addf %27, %28 : vector<2x32xf32>
    %30 = arith.mulf %17, %29 : vector<2x32xf32>
    %31 = arith.addf %26, %30 : vector<2x32xf32>
    %32 = math.tanh %31 : vector<2x32xf32>
    %cst_11 = arith.constant 1.000000e+00 : f32
    %33 = vector.broadcast %cst_11 : f32 to vector<2x32xf32>
    %34 = arith.subf %33, %25 : vector<2x32xf32>
    %35 = arith.mulf %34, %32 : vector<2x32xf32>
    %36 = arith.mulf %25, %5 : vector<2x32xf32>
    %37 = arith.addf %35, %36 : vector<2x32xf32>
    %38 = arith.index_cast %c0_i32_6 : i32 to index
    %c0_12 = arith.constant 0 : index
    %c0_13 = arith.constant 0 : index
    %39 = vector.load %arg5[%38, %c0_12, %c0_13] : memref<4x2x32xf32, #tpu.memory_space<vmem>>, vector<1x2x32xf32>
    %40 = vector.shape_cast %39 : vector<1x2x32xf32> to vector<2x32xf32>
    %41 = vector.shape_cast %37 : vector<2x32xf32> to vector<1x2x32xf32>
    tpu.vector_store %arg5[%38, %c0_12, %c0_13], %41 {strides = array<i32>} : memref<4x2x32xf32, #tpu.memory_space<vmem>>, vector<1x2x32xf32>,
    %c1_i32 = arith.constant 1 : i32
    %42 = arith.index_cast %c1_i32 : i32 to index
    %c0_14 = arith.constant 0 : index
    %c0_15 = arith.constant 0 : index
    %43 = vector.load %arg1[%42, %c0_14, %c0_15] : memref<4x2x96xf32, #tpu.memory_space<vmem>>, vector<1x2x96xf32>
    %44 = vector.shape_cast %43 : vector<1x2x96xf32> to vector<2x96xf32>
    %cst_16 = arith.constant dense<0.000000e+00> : vector<2x96xf32>
    %45 = tpu.matmul %37, %3, %cst_16 {dimension_numbers = #tpu.dot_dimension_numbers<[1], [0], [0], [1], [0, 0, 1, 1], [], []>} : vector<2x32xf32>, vector<32x96xf32>, vector<2x96xf32> -> vector<2x96xf32>
    %46 = vector.extract_strided_slice %44 {offsets = [0, 0], sizes = [2, 32], strides = [1, 1]} : vector<2x96xf32> to vector<2x32xf32>
    %47 = vector.extract_strided_slice %45 {offsets = [0, 0], sizes = [2, 32], strides = [1, 1]} : vector<2x96xf32> to vector<2x32xf32>
    %48 = arith.addf %46, %47 : vector<2x32xf32>
    %49 = arith.negf %48 : vector<2x32xf32>
    %50 = math.exp %49 : vector<2x32xf32>
    %cst_17 = arith.constant 1.000000e+00 : f32
    %51 = vector.broadcast %cst_17 : f32 to vector<2x32xf32>
    %52 = arith.addf %51, %50 : vector<2x32xf32>
    %53 = arith.divf %51, %52 : vector<2x32xf32>
    %54 = vector.extract_strided_slice %44 {offsets = [0, 32], sizes = [2, 32], strides = [1, 1]} : vector<2x96xf32> to vector<2x32xf32>
    %55 = vector.extract_strided_slice %45 {offsets = [0, 32], sizes = [2, 32], strides = [1, 1]} : vector<2x96xf32> to vector<2x32xf32>
    %56 = arith.addf %54, %55 : vector<2x32xf32>
    %57 = arith.negf %56 : vector<2x32xf32>
    %58 = math.exp %57 : vector<2x32xf32>
    %cst_18 = arith.constant 1.000000e+00 : f32
    %59 = vector.broadcast %cst_18 : f32 to vector<2x32xf32>
    %60 = arith.addf %59, %58 : vector<2x32xf32>
    %61 = arith.divf %59, %60 : vector<2x32xf32>
    %62 = vector.extract_strided_slice %44 {offsets = [0, 64], sizes = [2, 32], strides = [1, 1]} : vector<2x96xf32> to vector<2x32xf32>
    %63 = vector.extract_strided_slice %45 {offsets = [0, 64], sizes = [2, 32], strides = [1, 1]} : vector<2x96xf32> to vector<2x32xf32>
    %64 = vector.broadcast %4 : vector<1x32xf32> to vector<2x32xf32>
    %65 = arith.addf %63, %64 : vector<2x32xf32>
    %66 = arith.mulf %53, %65 : vector<2x32xf32>
    %67 = arith.addf %62, %66 : vector<2x32xf32>
    %68 = math.tanh %67 : vector<2x32xf32>
    %cst_19 = arith.constant 1.000000e+00 : f32
    %69 = vector.broadcast %cst_19 : f32 to vector<2x32xf32>
    %70 = arith.subf %69, %61 : vector<2x32xf32>
    %71 = arith.mulf %70, %68 : vector<2x32xf32>
    %72 = arith.mulf %61, %37 : vector<2x32xf32>
    %73 = arith.addf %71, %72 : vector<2x32xf32>
    %74 = arith.index_cast %c1_i32 : i32 to index
    %c0_20 = arith.constant 0 : index
    %c0_21 = arith.constant 0 : index
    %75 = vector.load %arg5[%74, %c0_20, %c0_21] : memref<4x2x32xf32, #tpu.memory_space<vmem>>, vector<1x2x32xf32>
    %76 = vector.shape_cast %75 : vector<1x2x32xf32> to vector<2x32xf32>
    %77 = vector.shape_cast %73 : vector<2x32xf32> to vector<1x2x32xf32>
    tpu.vector_store %arg5[%74, %c0_20, %c0_21], %77 {strides = array<i32>} : memref<4x2x32xf32, #tpu.memory_space<vmem>>, vector<1x2x32xf32>,
    %c2_i32 = arith.constant 2 : i32
    %78 = arith.index_cast %c2_i32 : i32 to index
    %c0_22 = arith.constant 0 : index
    %c0_23 = arith.constant 0 : index
    %79 = vector.load %arg1[%78, %c0_22, %c0_23] : memref<4x2x96xf32, #tpu.memory_space<vmem>>, vector<1x2x96xf32>
    %80 = vector.shape_cast %79 : vector<1x2x96xf32> to vector<2x96xf32>
    %cst_24 = arith.constant dense<0.000000e+00> : vector<2x96xf32>
    %81 = tpu.matmul %73, %3, %cst_24 {dimension_numbers = #tpu.dot_dimension_numbers<[1], [0], [0], [1], [0, 0, 1, 1], [], []>} : vector<2x32xf32>, vector<32x96xf32>, vector<2x96xf32> -> vector<2x96xf32>
    %82 = vector.extract_strided_slice %80 {offsets = [0, 0], sizes = [2, 32], strides = [1, 1]} : vector<2x96xf32> to vector<2x32xf32>
    %83 = vector.extract_strided_slice %81 {offsets = [0, 0], sizes = [2, 32], strides = [1, 1]} : vector<2x96xf32> to vector<2x32xf32>
    %84 = arith.addf %82, %83 : vector<2x32xf32>
    %85 = arith.negf %84 : vector<2x32xf32>
    %86 = math.exp %85 : vector<2x32xf32>
    %cst_25 = arith.constant 1.000000e+00 : f32
    %87 = vector.broadcast %cst_25 : f32 to vector<2x32xf32>
    %88 = arith.addf %87, %86 : vector<2x32xf32>
    %89 = arith.divf %87, %88 : vector<2x32xf32>
    %90 = vector.extract_strided_slice %80 {offsets = [0, 32], sizes = [2, 32], strides = [1, 1]} : vector<2x96xf32> to vector<2x32xf32>
    %91 = vector.extract_strided_slice %81 {offsets = [0, 32], sizes = [2, 32], strides = [1, 1]} : vector<2x96xf32> to vector<2x32xf32>
    %92 = arith.addf %90, %91 : vector<2x32xf32>
    %93 = arith.negf %92 : vector<2x32xf32>
    %94 = math.exp %93 : vector<2x32xf32>
    %cst_26 = arith.constant 1.000000e+00 : f32
    %95 = vector.broadcast %cst_26 : f32 to vector<2x32xf32>
    %96 = arith.addf %95, %94 : vector<2x32xf32>
    %97 = arith.divf %95, %96 : vector<2x32xf32>
    %98 = vector.extract_strided_slice %80 {offsets = [0, 64], sizes = [2, 32], strides = [1, 1]} : vector<2x96xf32> to vector<2x32xf32>
    %99 = vector.extract_strided_slice %81 {offsets = [0, 64], sizes = [2, 32], strides = [1, 1]} : vector<2x96xf32> to vector<2x32xf32>
    %100 = vector.broadcast %4 : vector<1x32xf32> to vector<2x32xf32>
    %101 = arith.addf %99, %100 : vector<2x32xf32>
    %102 = arith.mulf %89, %101 : vector<2x32xf32>
    %103 = arith.addf %98, %102 : vector<2x32xf32>
    %104 = math.tanh %103 : vector<2x32xf32>
    %cst_27 = arith.constant 1.000000e+00 : f32
    %105 = vector.broadcast %cst_27 : f32 to vector<2x32xf32>
    %106 = arith.subf %105, %97 : vector<2x32xf32>
    %107 = arith.mulf %106, %104 : vector<2x32xf32>
    %108 = arith.mulf %97, %73 : vector<2x32xf32>
    %109 = arith.addf %107, %108 : vector<2x32xf32>
    %110 = arith.index_cast %c2_i32 : i32 to index
    %c0_28 = arith.constant 0 : index
    %c0_29 = arith.constant 0 : index
    %111 = vector.load %arg5[%110, %c0_28, %c0_29] : memref<4x2x32xf32, #tpu.memory_space<vmem>>, vector<1x2x32xf32>
    %112 = vector.shape_cast %111 : vector<1x2x32xf32> to vector<2x32xf32>
    %113 = vector.shape_cast %109 : vector<2x32xf32> to vector<1x2x32xf32>
    tpu.vector_store %arg5[%110, %c0_28, %c0_29], %113 {strides = array<i32>} : memref<4x2x32xf32, #tpu.memory_space<vmem>>, vector<1x2x32xf32>,
    %c3_i32 = arith.constant 3 : i32
    %114 = arith.index_cast %c3_i32 : i32 to index
    %c0_30 = arith.constant 0 : index
    %c0_31 = arith.constant 0 : index
    %115 = vector.load %arg1[%114, %c0_30, %c0_31] : memref<4x2x96xf32, #tpu.memory_space<vmem>>, vector<1x2x96xf32>
    %116 = vector.shape_cast %115 : vector<1x2x96xf32> to vector<2x96xf32>
    %cst_32 = arith.constant dense<0.000000e+00> : vector<2x96xf32>
    %117 = tpu.matmul %109, %3, %cst_32 {dimension_numbers = #tpu.dot_dimension_numbers<[1], [0], [0], [1], [0, 0, 1, 1], [], []>} : vector<2x32xf32>, vector<32x96xf32>, vector<2x96xf32> -> vector<2x96xf32>
    %118 = vector.extract_strided_slice %116 {offsets = [0, 0], sizes = [2, 32], strides = [1, 1]} : vector<2x96xf32> to vector<2x32xf32>
    %119 = vector.extract_strided_slice %117 {offsets = [0, 0], sizes = [2, 32], strides = [1, 1]} : vector<2x96xf32> to vector<2x32xf32>
    %120 = arith.addf %118, %119 : vector<2x32xf32>
    %121 = arith.negf %120 : vector<2x32xf32>
    %122 = math.exp %121 : vector<2x32xf32>
    %cst_33 = arith.constant 1.000000e+00 : f32
    %123 = vector.broadcast %cst_33 : f32 to vector<2x32xf32>
    %124 = arith.addf %123, %122 : vector<2x32xf32>
    %125 = arith.divf %123, %124 : vector<2x32xf32>
    %126 = vector.extract_strided_slice %116 {offsets = [0, 32], sizes = [2, 32], strides = [1, 1]} : vector<2x96xf32> to vector<2x32xf32>
    %127 = vector.extract_strided_slice %117 {offsets = [0, 32], sizes = [2, 32], strides = [1, 1]} : vector<2x96xf32> to vector<2x32xf32>
    %128 = arith.addf %126, %127 : vector<2x32xf32>
    %129 = arith.negf %128 : vector<2x32xf32>
    %130 = math.exp %129 : vector<2x32xf32>
    %cst_34 = arith.constant 1.000000e+00 : f32
    %131 = vector.broadcast %cst_34 : f32 to vector<2x32xf32>
    %132 = arith.addf %131, %130 : vector<2x32xf32>
    %133 = arith.divf %131, %132 : vector<2x32xf32>
    %134 = vector.extract_strided_slice %116 {offsets = [0, 64], sizes = [2, 32], strides = [1, 1]} : vector<2x96xf32> to vector<2x32xf32>
    %135 = vector.extract_strided_slice %117 {offsets = [0, 64], sizes = [2, 32], strides = [1, 1]} : vector<2x96xf32> to vector<2x32xf32>
    %136 = vector.broadcast %4 : vector<1x32xf32> to vector<2x32xf32>
    %137 = arith.addf %135, %136 : vector<2x32xf32>
    %138 = arith.mulf %125, %137 : vector<2x32xf32>
    %139 = arith.addf %134, %138 : vector<2x32xf32>
    %140 = math.tanh %139 : vector<2x32xf32>
    %cst_35 = arith.constant 1.000000e+00 : f32
    %141 = vector.broadcast %cst_35 : f32 to vector<2x32xf32>
    %142 = arith.subf %141, %133 : vector<2x32xf32>
    %143 = arith.mulf %142, %140 : vector<2x32xf32>
    %144 = arith.mulf %133, %109 : vector<2x32xf32>
    %145 = arith.addf %143, %144 : vector<2x32xf32>
    %146 = arith.index_cast %c3_i32 : i32 to index
    %c0_36 = arith.constant 0 : index
    %c0_37 = arith.constant 0 : index
    %147 = vector.load %arg5[%146, %c0_36, %c0_37] : memref<4x2x32xf32, #tpu.memory_space<vmem>>, vector<1x2x32xf32>
    %148 = vector.shape_cast %147 : vector<1x2x32xf32> to vector<2x32xf32>
    %149 = vector.shape_cast %145 : vector<2x32xf32> to vector<1x2x32xf32>
    tpu.vector_store %arg5[%146, %c0_36, %c0_37], %149 {strides = array<i32>} : memref<4x2x32xf32, #tpu.memory_space<vmem>>, vector<1x2x32xf32>,
    %c4_i32 = arith.constant 4 : i32
    %c0_38 = arith.constant 0 : index
    %c0_39 = arith.constant 0 : index
    %150 = vector.load %arg7[%c0_38, %c0_39] : memref<2x32xf32, #tpu.memory_space<vmem>>, vector<2x32xf32>
    tpu.vector_store %arg7[%c0_38, %c0_39], %145 {strides = array<i32>} : memref<2x32xf32, #tpu.memory_space<vmem>>, vector<2x32xf32>,
    %c0_40 = arith.constant 0 : index
    %c0_41 = arith.constant 0 : index
    %c0_42 = arith.constant 0 : index
    %151 = vector.load %arg6[%c0_40, %c0_41, %c0_42] : memref<1x2x32xf32, #tpu.memory_space<vmem>>, vector<1x2x32xf32>
    %152 = vector.shape_cast %151 : vector<1x2x32xf32> to vector<2x32xf32>
    %153 = vector.shape_cast %145 : vector<2x32xf32> to vector<1x2x32xf32>
    tpu.vector_store %arg6[%c0_40, %c0_41, %c0_42], %153 {strides = array<i32>} : memref<1x2x32xf32, #tpu.memory_space<vmem>>, vector<1x2x32xf32>,
    return
  }
  func.func @transform_0(%arg0: i32) -> (i32, i32, i32) {
    %c0_i32 = arith.constant 0 : i32
    %c0_i32_0 = arith.constant 0 : i32
    %c0_i32_1 = arith.constant 0 : i32
    return %arg0, %c0_i32, %c0_i32_0 : i32, i32, i32
  }
  func.func @transform_1(%arg0: i32) -> (i32, i32) {
    %c0_i32 = arith.constant 0 : i32
    %c0_i32_0 = arith.constant 0 : i32
    %c0_i32_1 = arith.constant 0 : i32
    return %c0_i32, %c0_i32_0 : i32, i32
  }
  func.func @transform_2(%arg0: i32) -> (i32, i32) {
    %c0_i32 = arith.constant 0 : i32
    %c0_i32_0 = arith.constant 0 : i32
    %c0_i32_1 = arith.constant 0 : i32
    return %c0_i32, %c0_i32_0 : i32, i32
  }
  func.func @transform_3(%arg0: i32) -> (i32, i32) {
    %c0_i32 = arith.constant 0 : i32
    %c0_i32_0 = arith.constant 0 : i32
    %c0_i32_1 = arith.constant 0 : i32
    return %c0_i32, %c0_i32_0 : i32, i32
  }
  func.func @transform_4(%arg0: i32) -> (i32, i32, i32) {
    %c0_i32 = arith.constant 0 : i32
    %c0_i32_0 = arith.constant 0 : i32
    %c0_i32_1 = arith.constant 0 : i32
    return %arg0, %c0_i32, %c0_i32_0 : i32, i32, i32
  }
  func.func @transform_5(%arg0: i32) -> (i32, i32, i32) {
    %c0_i32 = arith.constant 0 : i32
    %c0_i32_0 = arith.constant 0 : i32
    %c0_i32_1 = arith.constant 0 : i32
    %c0_i32_2 = arith.constant 0 : i32
    return %c0_i32, %c0_i32_0, %c0_i32_1 : i32, i32, i32
  }
}

</mosaic_0001>

<llo_original>
// kernel: tpu_custom_call.1
$region0: #{tpu_custom_call.1}
  #allocation0 [shape = 'u32[]', space=smem, size = 0x4, offset = 0x4, fixed_abs, tag = 'smem constant byte address 0x4 - core index']
  #allocation1 [shape = 'u32[144,128]{1,0:T(1,128)}', space=vmem, size = 0x12000, scoped, tag = 'internal scratch']
  #allocation2 [shape = 'f32[2,32]{1,0:T(2,128)}', space=vmem, size = 0x400, scoped, tag = 'scratch operand']
  %s0 = inlined_call_operand.hbm [shape: f32[8,2,96], index: 0, kind: input, shape index: {}]
  %s1 = inlined_call_operand.hbm [shape: f32[32,96], index: 1, kind: input, shape index: {}]
  %s2 = inlined_call_operand.vmem [shape: f32[1,32], index: 2, kind: input, shape index: {}]
  %s3 = inlined_call_operand.vmem [shape: f32[2,32], index: 3, kind: input, shape index: {}]
  %s4 = inlined_call_operand.hbm [shape: f32[8,2,32], index: 4, kind: output, shape index: {0}]
  %s5 = inlined_call_operand.hbm [shape: f32[1,2,32], index: 5, kind: output, shape index: {1}]
  %6 = xla_tuple %s4, %s5
  %s7 = sld [smem:[#allocation0]]
  $region69: #{tpu_custom_call.1} parent=0
    _
  %s9 = ssub.s32 1, %s7
  %s10 = scalar_select 0, %s9, %s7
  $region1: #{tpu_custom_call.1} parent=0
    #allocation3 [shape = 'u8[8192]{0}', space=vmem, size = 0x2000, scoped, tag = 'input window, operand 0']
    #allocation4 [shape = 's32[2]{0}', space=sflag, size = 0x8, scoped, tag = 'scoped memory for tpu_custom_call.1']
    #allocation5 [shape = 's32[2]{0}', space=sflag, size = 0x8, scoped, tag = 'scoped memory for tpu_custom_call.1']
    #allocation6 [shape = 'u8[16384]{0}', space=vmem, size = 0x4000, scoped, tag = 'input window, operand 1, single buffered']
    #allocation7 [shape = 's32[1]{0}', space=sflag, size = 0x4, scoped, tag = 'scoped memory for tpu_custom_call.1']
    #allocation8 [shape = 'u8[8192]{0}', space=vmem, size = 0x2000, scoped, tag = 'output window, operand 0']
    #allocation9 [shape = 'u8[1024]{0}', space=vmem, size = 0x400, scoped, tag = 'output window, operand 1, single buffered']
    #allocation10 [shape = 's32[1]{0}', space=sflag, size = 0x4, scoped, tag = 'scoped memory for tpu_custom_call.1']
    %11 = vsyncpa [#allocation4], 0
    %s12 = scalar_lea.sflag [#allocation4], 1
    %13 = vsyncpa %s12, 0
    %14 = vsyncpa [#allocation7], 0
    %15 = vsyncpa [#allocation5], 0
    %s16 = scalar_lea.sflag [#allocation5], 1
    %17 = vsyncpa %s16, 0
    %18 = vsyncpa [#allocation10], 0
    loop: start=0, step=1, limit=4
    $region2: #{tpu_custom_call.1} parent=1 // loop_pre_header
      _
    $region3: #{tpu_custom_call.1} parent=1 // loop_header
      %s20 = sphi 0, %s24
      %p21 = scmp.ge.s32.totalorder %s20, 4
      %s30 = sphi 0, %s32
      %s33 = sphi 0, %s30
      %s34 = sphi 0, %s33
      %s50 = sphi 0, %s34
      %s54 = sphi 0, %s54
      %s56 = sphi 0, %s54
      %s57 = sphi 0, %s56
      %s71 = sphi 0, %s57
      %s75 = sphi 0, %s75
      %s77 = sphi 0, %s75
      %s78 = sphi 0, %s77
      %s92 = sphi 0, %s78
      %s96 = sphi 0, %s96
      %s98 = sphi 0, %s96
      %s99 = sphi 0, %s98
      %s113 = sphi 0, %s99
      %s119 = sphi 0, %s121
      %s122 = sphi 0, %s119
      %s123 = sphi 0, %s122
      %s139 = sphi 0, %s123
      %s143 = sphi 0, %s143
      %s145 = sphi 0, %s143
      %s146 = sphi 0, %s145
      %s160 = sphi 0, %s146
    $region4: #{tpu_custom_call.1} parent=1 // loop_header_branch
      %23 = sbr.rel (%p21) target = $region8
    $region5: #{tpu_custom_call.1} parent=1 // loop_body
      %s25 = ssub.s32 %s20, 1
      %s26 = ssub.s32 %s20, 2
      %s27 = sadd.s32 %s20, 1
      %s28 = ssub.s32 %s20, %s27
      %p29 = scmp.eq.s32.totalorder %s28, 0
      %s31 = sadd.s32 %s30, 1
      %s32 = scalar_select %p29, %s30, %s31
      %p35 = pneg %p29
      %p36 = scmp.eq.s32.totalorder %s20, 1
      %p37 = por %p35, %p36
      %p38 = scmp.ne.s32.totalorder %s30, %s33
      %p39 = scmp.eq.s32.totalorder %s20, 0
      %p40 = por %p38, %p39
      %p41 = scmp.ne.s32.totalorder %s30, %s33
      %p42 = scmp.eq.s32.totalorder %s25, 1
      %p43 = por %p41, %p42
      %p44 = scmp.ne.s32.totalorder %s33, %s34
      %p45 = scmp.eq.s32.totalorder %s25, 0
      %p46 = por %p44, %p45
      %p47 = scmp.ne.s32.totalorder %s33, %s34
      %p48 = scmp.eq.s32.totalorder %s26, 1
      %p49 = por %p47, %p48
      %p51 = scmp.ne.s32.totalorder %s34, %s50
      %p52 = scmp.eq.s32.totalorder %s26, 0
      %p53 = por %p51, %p52
      %s55 = sadd.s32 %s54, 1
      %p58 = scmp.eq.s32.totalorder %s20, 1
      %p59 = scmp.ne.s32.totalorder %s54, %s56
      %p60 = scmp.eq.s32.totalorder %s20, 0
      %p61 = por %p59, %p60
      %p62 = scmp.ne.s32.totalorder %s54, %s56
      %p63 = scmp.eq.s32.totalorder %s25, 1
      %p64 = por %p62, %p63
      %p65 = scmp.ne.s32.totalorder %s56, %s57
      %p66 = scmp.eq.s32.totalorder %s25, 0
      %p67 = por %p65, %p66
      %p68 = scmp.ne.s32.totalorder %s56, %s57
      %p69 = scmp.eq.s32.totalorder %s26, 1
      %p70 = por %p68, %p69
      %p72 = scmp.ne.s32.totalorder %s57, %s71
      %p73 = scmp.eq.s32.totalorder %s26, 0
      %p74 = por %p72, %p73
      %s76 = sadd.s32 %s75, 1
      %p79 = scmp.eq.s32.totalorder %s20, 1
      %p80 = scmp.ne.s32.totalorder %s75, %s77
      %p81 = scmp.eq.s32.totalorder %s20, 0
      %p82 = por %p80, %p81
      %p83 = scmp.ne.s32.totalorder %s75, %s77
      %p84 = scmp.eq.s32.totalorder %s25, 1
      %p85 = por %p83, %p84
      %p86 = scmp.ne.s32.totalorder %s77, %s78
      %p87 = scmp.eq.s32.totalorder %s25, 0
      %p88 = por %p86, %p87
      %p89 = scmp.ne.s32.totalorder %s77, %s78
      %p90 = scmp.eq.s32.totalorder %s26, 1
      %p91 = por %p89, %p90
      %p93 = scmp.ne.s32.totalorder %s78, %s92
      %p94 = scmp.eq.s32.totalorder %s26, 0
      %p95 = por %p93, %p94
      %s97 = sadd.s32 %s96, 1
      %p100 = scmp.eq.s32.totalorder %s20, 1
      %p101 = scmp.ne.s32.totalorder %s96, %s98
      %p102 = scmp.eq.s32.totalorder %s20, 0
      %p103 = por %p101, %p102
      %p104 = scmp.ne.s32.totalorder %s96, %s98
      %p105 = scmp.eq.s32.totalorder %s25, 1
      %p106 = por %p104, %p105
      %p107 = scmp.ne.s32.totalorder %s98, %s99
      %p108 = scmp.eq.s32.totalorder %s25, 0
      %p109 = por %p107, %p108
      %p110 = scmp.ne.s32.totalorder %s98, %s99
      %p111 = scmp.eq.s32.totalorder %s26, 1
      %p112 = por %p110, %p111
      %p114 = scmp.ne.s32.totalorder %s99, %s113
      %p115 = scmp.eq.s32.totalorder %s26, 0
      %p116 = por %p114, %p115
      %s117 = ssub.s32 %s20, %s27
      %p118 = scmp.eq.s32.totalorder %s117, 0
      %s120 = sadd.s32 %s119, 1
      %s121 = scalar_select %p118, %s119, %s120
      %p124 = pneg %p118
      %p125 = scmp.eq.s32.totalorder %s20, 1
      %p126 = por %p124, %p125
      %p127 = scmp.ne.s32.totalorder %s119, %s122
      %p128 = scmp.eq.s32.totalorder %s20, 0
      %p129 = por %p127, %p128
      %p130 = scmp.ne.s32.totalorder %s119, %s122
      %p131 = scmp.eq.s32.totalorder %s25, 1
      %p132 = por %p130, %p131
      %p133 = scmp.ne.s32.totalorder %s122, %s123
      %p134 = scmp.eq.s32.totalorder %s25, 0
      %p135 = por %p133, %p134
      %p136 = scmp.ne.s32.totalorder %s122, %s123
      %p137 = scmp.eq.s32.totalorder %s26, 1
      %p138 = por %p136, %p137
      %p140 = scmp.ne.s32.totalorder %s123, %s139
      %p141 = scmp.eq.s32.totalorder %s26, 0
      %p142 = por %p140, %p141
      %s144 = sadd.s32 %s143, 1
      %p147 = scmp.eq.s32.totalorder %s20, 1
      %p148 = scmp.ne.s32.totalorder %s143, %s145
      %p149 = scmp.eq.s32.totalorder %s20, 0
      %p150 = por %p148, %p149
      %p151 = scmp.ne.s32.totalorder %s143, %s145
      %p152 = scmp.eq.s32.totalorder %s25, 1
      %p153 = por %p151, %p152
      %p154 = scmp.ne.s32.totalorder %s145, %s146
      %p155 = scmp.eq.s32.totalorder %s25, 0
      %p156 = por %p154, %p155
      %p157 = scmp.ne.s32.totalorder %s145, %s146
      %p158 = scmp.eq.s32.totalorder %s26, 1
      %p159 = por %p157, %p158
      %p161 = scmp.ne.s32.totalorder %s146, %s160
      %p162 = scmp.eq.s32.totalorder %s26, 0
      %p163 = por %p161, %p162
      %p164 = scmp.le.s32.totalorder 1, %s20
      %p165 = scmp.lt.s32.totalorder %s20, 3
      %p166 = pnand %p164, %p165
      %p167 = pneg %p166
      // Predicated region
      $region9: #{tpu_custom_call.1} parent=5 // pred_check
        _
      $region10: #{tpu_custom_call.1} parent=5 // pred_check_branch
        %169 = sbr.rel (%p166) target = $region12
      $region11: #{tpu_custom_call.1} parent=5 // pred_region
        %s170 = ssub.s32 %s20, 1
        // Predicated region
        $region13: #{tpu_custom_call.1} parent=11 // pred_check
          %p171 = pneg %p67
        $region14: #{tpu_custom_call.1} parent=11 // pred_check_branch
          %173 = sbr.rel (%p171) target = $region16
        $region15: #{tpu_custom_call.1} parent=11 // pred_region
          %s175 = ssub.s32 512, 512
          %176 = vsyncadd [#allocation7], %s175
          %s177 = sshll.u32 [#allocation6], 4
          %s178 = int_to_ptr.vmem [resolvable:$true] %s177
          %183 = dma.hbm_to_vmem [thread:$0]  %s1, 512, %s178, [#allocation7], 128, 128, 8
        $region16: #{tpu_custom_call.1} parent=11 // pred_fallthru
          _
        // Predicated region
        $region17: #{tpu_custom_call.1} parent=11 // pred_check
          %p184 = pneg %p88
        $region18: #{tpu_custom_call.1} parent=11 // pred_check_branch
          %186 = sbr.rel (%p184) target = $region20
        $region19: #{tpu_custom_call.1} parent=11 // pred_region
          _
        $region20: #{tpu_custom_call.1} parent=11 // pred_fallthru
          _
        // Predicated region
        $region21: #{tpu_custom_call.1} parent=11 // pred_check
          %p187 = pneg %p109
        $region22: #{tpu_custom_call.1} parent=11 // pred_check_branch
          %189 = sbr.rel (%p187) target = $region24
        $region23: #{tpu_custom_call.1} parent=11 // pred_region
          _
        $region24: #{tpu_custom_call.1} parent=11 // pred_fallthru
          _
      $region12: #{tpu_custom_call.1} parent=5 // pred_fallthru
        _
      %p190 = scmp.lt.s32.totalorder %s20, 2
      // Predicated region
      $region25: #{tpu_custom_call.1} parent=5 // pred_check
        %p191 = pneg %p190
      $region26: #{tpu_custom_call.1} parent=5 // pred_check_branch
        %193 = sbr.rel (%p191) target = $region28
      $region27: #{tpu_custom_call.1} parent=5 // pred_region
        // Predicated region
        $region29: #{tpu_custom_call.1} parent=27 // pred_check
          %p194 = pneg %p40
        $region30: #{tpu_custom_call.1} parent=27 // pred_check_branch
          %196 = sbr.rel (%p194) target = $region32
        $region31: #{tpu_custom_call.1} parent=27 // pred_region
          %s197 = sand.u32 %s30, 1
          %s198 = scalar_lea.sflag [#allocation4], %s197
          %s199 = sand.u32 %s30, 1
          %s200 = smul.addr %s199, 8
          %s201 = scalar_lea.vmem [#allocation3], %s200
          %s202 = smul.u32 4, %s20
          %s204 = ssub.s32 128, 128
          %205 = vsyncadd %s198, %s204
          %s206 = smul.addr %s202, 32
          %s207 = scalar_lea.hbm %s0, %s206
          %s208 = sshll.u32 %s201, 4
          %s209 = int_to_ptr.vmem [resolvable:$true] %s208
          %214 = dma.hbm_to_vmem [thread:$0]  %s207, 128, %s209, %s198, 32, 32, 2
        $region32: #{tpu_custom_call.1} parent=27 // pred_fallthru
          _
      $region28: #{tpu_custom_call.1} parent=5 // pred_fallthru
        _
      %p215 = scmp.le.s32.totalorder 1, %s20
      %p216 = scmp.lt.s32.totalorder %s20, 3
      %p217 = pnand %p215, %p216
      %p218 = pneg %p217
      // Predicated region
      $region33: #{tpu_custom_call.1} parent=5 // pred_check
        _
      $region34: #{tpu_custom_call.1} parent=5 // pred_check_branch
        %220 = sbr.rel (%p217) target = $region36
      $region35: #{tpu_custom_call.1} parent=5 // pred_region
        %s221 = ssub.s32 %s20, 1
        %s222 = sand.u32 %s33, 1
        %s223 = scalar_lea.sflag [#allocation4], %s222
        %s224 = sand.u32 %s33, 1
        %s225 = smul.addr %s224, 8
        %s226 = scalar_lea.vmem [#allocation3], %s225
        // Predicated region
        $region37: #{tpu_custom_call.1} parent=35 // pred_check
          %p227 = pneg %p46
        $region38: #{tpu_custom_call.1} parent=35 // pred_check_branch
          %229 = sbr.rel (%p227) target = $region40
        $region39: #{tpu_custom_call.1} parent=35 // pred_region
          %230 = dma.done %s223, 128
        $region40: #{tpu_custom_call.1} parent=35 // pred_fallthru
          _
        // Predicated region
        $region41: #{tpu_custom_call.1} parent=35 // pred_check
          %p231 = pneg %p67
        $region42: #{tpu_custom_call.1} parent=35 // pred_check_branch
          %233 = sbr.rel (%p231) target = $region44
        $region43: #{tpu_custom_call.1} parent=35 // pred_region
          %234 = dma.done [#allocation7], 512
        $region44: #{tpu_custom_call.1} parent=35 // pred_fallthru
          _
        %s235 = sand.u32 %s33, 1
        %s236 = scalar_lea.sflag [#allocation4], %s235
        %s237 = sand.u32 %s33, 1
        %s238 = smul.addr %s237, 8
        %s239 = scalar_lea.vmem [#allocation3], %s238
        %p240 = pneg %p46
        %p241 = pneg %p43
        %p242 = pneg %p67
        %p243 = pneg %p64
        %p244 = pneg %p88
        %p245 = pneg %p85
        %p246 = pneg %p109
        %p247 = pneg %p106
        %p248 = pneg %p135
        %p249 = pneg %p132
        %s250 = sand.u32 %s122, 1
        %s251 = scalar_lea.sflag [#allocation5], %s250
        %s252 = sand.u32 %s122, 1
        %s253 = smul.addr %s252, 8
        %s254 = scalar_lea.vmem [#allocation8], %s253
        %p255 = pneg %p156
        %p256 = pneg %p153
        %s257 = smul.u32 4, %s25
        %s258 = smul.u32 4, %s25
        %p259 = scmp.eq.s32.totalorder %s25, 0
        // Predicated region
        $region45: #{tpu_custom_call.1} parent=35 // pred_check
          %p260 = pneg %p259
        $region46: #{tpu_custom_call.1} parent=35 // pred_check_branch
          %262 = sbr.rel (%p260) target = $region48
        $region47: #{tpu_custom_call.1} parent=35 // pred_region
          %v263 = vld [vmem:[%s3] sm:$0x3]
          %vm264 = vcmask 254976
          %265 = vst.msk [vmem:[#allocation2] sm:$0x3] %vm264, %v263
        $region48: #{tpu_custom_call.1} parent=35 // pred_fallthru
          _
        %v266 = vld [vmem:[#allocation6] sm:$0xff]
        %v267 = vld [vmem:[#allocation6 + $0x8] sm:$0xff]
        %v268 = vld [vmem:[#allocation6 + $0x10] sm:$0xff]
        %v269 = vld [vmem:[#allocation6 + $0x18] sm:$0xff]
        %v270 = vld [vmem:[%s2] sm:$0x1]
        %v271 = vld [vmem:[#allocation2] sm:$0x3]
        %v272 = vld [vmem:[%s226] sm:$0x3]
        %vm273 = vcmask 261120
        %v275 = vsel %vm273, %v271, 0
        %277 = vmatprep.subr.mxu0 0.0
        %278 = vmatpush1.msra.mxu0 %v266
        %279 = vmatprep.subr.mxu0 0.0
        %280 = vmatpush1.msra.mxu0 %v267
        %281 = vmatprep.subr.mxu0 0.0
        %282 = vmatpush1.msra.mxu0 %v268
        %283 = vmatprep.subr.mxu0 0.0
        %284 = vmatpush1.msra.mxu0 %v269
        %285 = vmatprep.subr.mxu0 0.0
        %286 = vmatpush1.msra.mxu0 0.0
        %287 = vmatprep.subr.mxu0 0.0
        %288 = vmatpush1.msra.mxu0 0.0
        %289 = vmatprep.subr.mxu0 0.0
        %290 = vmatpush1.msra.mxu0 0.0
        %291 = vmatprep.subr.mxu0 0.0
        %292 = vmatpush1.msra.mxu0 0.0
        %293 = vmatprep.subr.mxu0 0.0
        %294 = vmatpush1.msra.mxu0 0.0
        %295 = vmatprep.subr.mxu0 0.0
        %296 = vmatpush1.msra.mxu0 0.0
        %297 = vmatprep.subr.mxu0 0.0
        %298 = vmatpush1.msra.mxu0 0.0
        %299 = vmatprep.subr.mxu0 0.0
        %300 = vmatpush1.msra.mxu0 0.0
        %301 = vmatprep.subr.mxu0 0.0
        %302 = vmatpush1.msra.mxu0 0.0
        %303 = vmatprep.subr.mxu0 0.0
        %304 = vmatpush1.msra.mxu0 0.0
        %305 = vmatprep.subr.mxu0 0.0
        %306 = vmatpush1.msra.mxu0 0.0
        %307 = vmatprep.subr.mxu0 0.0
        %308 = vmatpush1.msra.mxu0 0.0
        %309 = vmatprep.subr.mxu0 0.0
        %310 = vmatpush1.msra.mxu0 0.0
        %311 = vmatprep.subr.mxu0 0.0
        %312 = vmatpush1.msra.mxu0 0.0
        %313 = vmatprep.subr.mxu0 0.0
        %314 = vmatpush1.msra.mxu0 0.0
        %315 = vmatprep.subr.mxu0 0.0
        %316 = vmatpush1.msra.mxu0 0.0
        %317 = vmatprep.subr.mxu0 0.0
        %318 = vmatpush1.msra.mxu0 0.0
        %319 = vmatprep.subr.mxu0 0.0
        %320 = vmatpush1.msra.mxu0 0.0
        %321 = vmatprep.subr.mxu0 0.0
        %322 = vmatpush1.msra.mxu0 0.0
        %323 = vmatprep.subr.mxu0 0.0
        %324 = vmatpush1.msra.mxu0 0.0
        %325 = vmatprep.subr.mxu0 0.0
        %326 = vmatpush1.msra.mxu0 0.0
        %327 = vmatprep.subr.mxu0 0.0
        %328 = vmatpush1.msra.mxu0 0.0
        %329 = vmatprep.subr.mxu0 0.0
        %330 = vmatpush1.msra.mxu0 0.0
        %331 = vmatprep.subr.mxu0 0.0
        %332 = vmatpush1.msra.mxu0 0.0
        %333 = vmatprep.subr.mxu0 0.0
        %334 = vmatpush1.msra.mxu0 0.0
        %335 = vmatprep.subr.mxu0 0.0
        %336 = vmatpush1.msra.mxu0 0.0
        %337 = vmatprep.subr.mxu0 0.0
        %338 = vmatpush1.msra.mxu0 0.0
        %339 = vmatprep.subr.mxu0 0.0
        %340 = vmatpush1.msra.mxu0 0.0
        %341 = vmatprep.mubr.f32.mxu0 0.0
        %342 = vmatmul.mubr.f32.gmra.mrb[0].mxu0 %v275
        %v343 = vpop.f32.mrb[0].mxu0
        %v344 = vadd.f32 0.0, %v343
        %v345 = vpop.f32.mrb[0].mxu0
        %346 = vdwg.mxu0
        %v347 = vadd.f32 %v272, %v344
        %v348 = vxor.u32 %v347, 2147483648
        %v349 = vmul.f32 %v348, 1.442695
        %v350 = vpow.pop %v349
        %v351 = vadd.f32 %v350, 1.0
        %v352 = vrcp.pop %v351
        %v353 = vmul.f32 1.0, %v352
        %v355 = vlaneseq
        %v356 = vshrl.u32 %v355, 7
        %v357 = vsub.s32 0, %v356
        %v358 = vrot.slane %v270, %v357
        %359 = vrot.lane.b32.xlu0 %v358, 64
        %v360 = vpop.permute.xlu0 %359
        %v362 = vadd.f32 %v344, %v360
        %364 = vrot.lane.b32.xlu0 %v362, 64
        %v365 = vpop.permute.xlu0 %364
        %v367 = vmul.f32 %v353, %v365
        %369 = vrot.lane.b32.xlu0 %v367, 64
        %v370 = vpop.permute.xlu0 %369
        %v372 = vadd.f32 %v272, %v370
        %v373 = vtanh.pop %v372
        %v374 = vsub.f32 1.0, %v353
        %376 = vrot.lane.b32.xlu0 %v373, 96
        %v377 = vpop.permute.xlu0 %376
        %v379 = vmul.f32 %v374, %v377
        %380 = vrot.lane.b32.xlu0 %v271, 32
        %v381 = vpop.permute.xlu0 %380
        %v383 = vmul.f32 %v353, %v381
        %v384 = vadd.f32 %v379, %v383
        %386 = vrot.lane.b32.xlu0 %v384, 96
        %v387 = vpop.permute.xlu0 %386
        %vm389 = vcmask 254976
        %390 = vst.msk [vmem:[%s254] sm:$0x3] %vm389, %v387
        %s391 = scalar_lea.vmem %s226, 2 [#allocation3]
        %v392 = vld [vmem:[%s391] sm:$0x3]
        %v393 = vsel %vm273, %v387, 0
        %395 = vmatprep.subr.mxu0 0.0
        %396 = vmatpush1.msra.mxu0 %v266
        %397 = vmatprep.subr.mxu0 0.0
        %398 = vmatpush1.msra.mxu0 %v267
        %399 = vmatprep.subr.mxu0 0.0
        %400 = vmatpush1.msra.mxu0 %v268
        %401 = vmatprep.subr.mxu0 0.0
        %402 = vmatpush1.msra.mxu0 %v269
        %403 = vmatprep.subr.mxu0 0.0
        %404 = vmatpush1.msra.mxu0 0.0
        %405 = vmatprep.subr.mxu0 0.0
        %406 = vmatpush1.msra.mxu0 0.0
        %407 = vmatprep.subr.mxu0 0.0
        %408 = vmatpush1.msra.mxu0 0.0
        %409 = vmatprep.subr.mxu0 0.0
        %410 = vmatpush1.msra.mxu0 0.0
        %411 = vmatprep.subr.mxu0 0.0
        %412 = vmatpush1.msra.mxu0 0.0
        %413 = vmatprep.subr.mxu0 0.0
        %414 = vmatpush1.msra.mxu0 0.0
        %415 = vmatprep.subr.mxu0 0.0
        %416 = vmatpush1.msra.mxu0 0.0
        %417 = vmatprep.subr.mxu0 0.0
        %418 = vmatpush1.msra.mxu0 0.0
        %419 = vmatprep.subr.mxu0 0.0
        %420 = vmatpush1.msra.mxu0 0.0
        %421 = vmatprep.subr.mxu0 0.0
        %422 = vmatpush1.msra.mxu0 0.0
        %423 = vmatprep.subr.mxu0 0.0
        %424 = vmatpush1.msra.mxu0 0.0
        %425 = vmatprep.subr.mxu0 0.0
        %426 = vmatpush1.msra.mxu0 0.0
        %427 = vmatprep.subr.mxu0 0.0
        %428 = vmatpush1.msra.mxu0 0.0
        %429 = vmatprep.subr.mxu0 0.0
        %430 = vmatpush1.msra.mxu0 0.0
        %431 = vmatprep.subr.mxu0 0.0
        %432 = vmatpush1.msra.mxu0 0.0
        %433 = vmatprep.subr.mxu0 0.0
        %434 = vmatpush1.msra.mxu0 0.0
        %435 = vmatprep.subr.mxu0 0.0
        %436 = vmatpush1.msra.mxu0 0.0
        %437 = vmatprep.subr.mxu0 0.0
        %438 = vmatpush1.msra.mxu0 0.0
        %439 = vmatprep.subr.mxu0 0.0
        %440 = vmatpush1.msra.mxu0 0.0
        %441 = vmatprep.subr.mxu0 0.0
        %442 = vmatpush1.msra.mxu0 0.0
        %443 = vmatprep.subr.mxu0 0.0
        %444 = vmatpush1.msra.mxu0 0.0
        %445 = vmatprep.subr.mxu0 0.0
        %446 = vmatpush1.msra.mxu0 0.0
        %447 = vmatprep.subr.mxu0 0.0
        %448 = vmatpush1.msra.mxu0 0.0
        %449 = vmatprep.subr.mxu0 0.0
        %450 = vmatpush1.msra.mxu0 0.0
        %451 = vmatprep.subr.mxu0 0.0
        %452 = vmatpush1.msra.mxu0 0.0
        %453 = vmatprep.subr.mxu0 0.0
        %454 = vmatpush1.msra.mxu0 0.0
        %455 = vmatprep.subr.mxu0 0.0
        %456 = vmatpush1.msra.mxu0 0.0
        %457 = vmatprep.subr.mxu0 0.0
        %458 = vmatpush1.msra.mxu0 0.0
        %459 = vmatprep.mubr.f32.mxu0 0.0
        %460 = vmatmul.mubr.f32.gmra.mrb[0].mxu0 %v393
        %v461 = vpop.f32.mrb[0].mxu0
        %v462 = vadd.f32 0.0, %v461
        %v463 = vpop.f32.mrb[0].mxu0
        %464 = vdwg.mxu0
        %v465 = vadd.f32 %v392, %v462
        %v466 = vxor.u32 %v465, 2147483648
        %v467 = vmul.f32 %v466, 1.442695
        %v468 = vpow.pop %v467
        %v469 = vadd.f32 %v468, 1.0
        %v470 = vrcp.pop %v469
        %v471 = vmul.f32 1.0, %v470
        %v472 = vadd.f32 %v462, %v360
        %474 = vrot.lane.b32.xlu0 %v472, 64
        %v475 = vpop.permute.xlu0 %474
        %v477 = vmul.f32 %v471, %v475
        %479 = vrot.lane.b32.xlu0 %v477, 64
        %v480 = vpop.permute.xlu0 %479
        %v482 = vadd.f32 %v392, %v480
        %v483 = vtanh.pop %v482
        %v484 = vsub.f32 1.0, %v471
        %486 = vrot.lane.b32.xlu0 %v483, 96
        %v487 = vpop.permute.xlu0 %486
        %v489 = vmul.f32 %v484, %v487
        %v490 = vmul.f32 %v471, %v384
        %v491 = vadd.f32 %v489, %v490
        %493 = vrot.lane.b32.xlu0 %v491, 96
        %v494 = vpop.permute.xlu0 %493
        %s496 = scalar_lea.vmem %s254, 2 [#allocation8]
        %497 = vst.msk [vmem:[%s496] sm:$0x3] %vm389, %v494
        %s498 = scalar_lea.vmem %s226, 4 [#allocation3]
        %v499 = vld [vmem:[%s498] sm:$0x3]
        %v500 = vsel %vm273, %v494, 0
        %502 = vmatprep.subr.mxu0 0.0
        %503 = vmatpush1.msra.mxu0 %v266
        %504 = vmatprep.subr.mxu0 0.0
        %505 = vmatpush1.msra.mxu0 %v267
        %506 = vmatprep.subr.mxu0 0.0
        %507 = vmatpush1.msra.mxu0 %v268
        %508 = vmatprep.subr.mxu0 0.0
        %509 = vmatpush1.msra.mxu0 %v269
        %510 = vmatprep.subr.mxu0 0.0
        %511 = vmatpush1.msra.mxu0 0.0
        %512 = vmatprep.subr.mxu0 0.0
        %513 = vmatpush1.msra.mxu0 0.0
        %514 = vmatprep.subr.mxu0 0.0
        %515 = vmatpush1.msra.mxu0 0.0
        %516 = vmatprep.subr.mxu0 0.0
        %517 = vmatpush1.msra.mxu0 0.0
        %518 = vmatprep.subr.mxu0 0.0
        %519 = vmatpush1.msra.mxu0 0.0
        %520 = vmatprep.subr.mxu0 0.0
        %521 = vmatpush1.msra.mxu0 0.0
        %522 = vmatprep.subr.mxu0 0.0
        %523 = vmatpush1.msra.mxu0 0.0
        %524 = vmatprep.subr.mxu0 0.0
        %525 = vmatpush1.msra.mxu0 0.0
        %526 = vmatprep.subr.mxu0 0.0
        %527 = vmatpush1.msra.mxu0 0.0
        %528 = vmatprep.subr.mxu0 0.0
        %529 = vmatpush1.msra.mxu0 0.0
        %530 = vmatprep.subr.mxu0 0.0
        %531 = vmatpush1.msra.mxu0 0.0
        %532 = vmatprep.subr.mxu0 0.0
        %533 = vmatpush1.msra.mxu0 0.0
        %534 = vmatprep.subr.mxu0 0.0
        %535 = vmatpush1.msra.mxu0 0.0
        %536 = vmatprep.subr.mxu0 0.0
        %537 = vmatpush1.msra.mxu0 0.0
        %538 = vmatprep.subr.mxu0 0.0
        %539 = vmatpush1.msra.mxu0 0.0
        %540 = vmatprep.subr.mxu0 0.0
        %541 = vmatpush1.msra.mxu0 0.0
        %542 = vmatprep.subr.mxu0 0.0
        %543 = vmatpush1.msra.mxu0 0.0
        %544 = vmatprep.subr.mxu0 0.0
        %545 = vmatpush1.msra.mxu0 0.0
        %546 = vmatprep.subr.mxu0 0.0
        %547 = vmatpush1.msra.mxu0 0.0
        %548 = vmatprep.subr.mxu0 0.0
        %549 = vmatpush1.msra.mxu0 0.0
        %550 = vmatprep.subr.mxu0 0.0
        %551 = vmatpush1.msra.mxu0 0.0
        %552 = vmatprep.subr.mxu0 0.0
        %553 = vmatpush1.msra.mxu0 0.0
        %554 = vmatprep.subr.mxu0 0.0
        %555 = vmatpush1.msra.mxu0 0.0
        %556 = vmatprep.subr.mxu0 0.0
        %557 = vmatpush1.msra.mxu0 0.0
        %558 = vmatprep.subr.mxu0 0.0
        %559 = vmatpush1.msra.mxu0 0.0
        %560 = vmatprep.subr.mxu0 0.0
        %561 = vmatpush1.msra.mxu0 0.0
        %562 = vmatprep.subr.mxu0 0.0
        %563 = vmatpush1.msra.mxu0 0.0
        %564 = vmatprep.subr.mxu0 0.0
        %565 = vmatpush1.msra.mxu0 0.0
        %566 = vmatprep.mubr.f32.mxu0 0.0
        %567 = vmatmul.mubr.f32.gmra.mrb[0].mxu0 %v500
        %v568 = vpop.f32.mrb[0].mxu0
        %v569 = vadd.f32 0.0, %v568
        %v570 = vpop.f32.mrb[0].mxu0
        %571 = vdwg.mxu0
        %v572 = vadd.f32 %v499, %v569
        %v573 = vxor.u32 %v572, 2147483648
        %v574 = vmul.f32 %v573, 1.442695
        %v575 = vpow.pop %v574
        %v576 = vadd.f32 %v575, 1.0
        %v577 = vrcp.pop %v576
        %v578 = vmul.f32 1.0, %v577
        %v579 = vadd.f32 %v569, %v360
        %581 = vrot.lane.b32.xlu0 %v579, 64
        %v582 = vpop.permute.xlu0 %581
        %v584 = vmul.f32 %v578, %v582
        %586 = vrot.lane.b32.xlu0 %v584, 64
        %v587 = vpop.permute.xlu0 %586
        %v589 = vadd.f32 %v499, %v587
        %v590 = vtanh.pop %v589
        %v591 = vsub.f32 1.0, %v578
        %593 = vrot.lane.b32.xlu0 %v590, 96
        %v594 = vpop.permute.xlu0 %593
        %v596 = vmul.f32 %v591, %v594
        %v597 = vmul.f32 %v578, %v491
        %v598 = vadd.f32 %v596, %v597
        %600 = vrot.lane.b32.xlu0 %v598, 96
        %v601 = vpop.permute.xlu0 %600
        %s603 = scalar_lea.vmem %s254, 4 [#allocation8]
        %604 = vst.msk [vmem:[%s603] sm:$0x3] %vm389, %v601
        %s605 = scalar_lea.vmem %s226, 6 [#allocation3]
        %v606 = vld [vmem:[%s605] sm:$0x3]
        %v607 = vsel %vm273, %v601, 0
        %609 = vmatprep.subr.mxu0 0.0
        %610 = vmatpush1.msra.mxu0 %v266
        %611 = vmatprep.subr.mxu0 0.0
        %612 = vmatpush1.msra.mxu0 %v267
        %613 = vmatprep.subr.mxu0 0.0
        %614 = vmatpush1.msra.mxu0 %v268
        %615 = vmatprep.subr.mxu0 0.0
        %616 = vmatpush1.msra.mxu0 %v269
        %617 = vmatprep.subr.mxu0 0.0
        %618 = vmatpush1.msra.mxu0 0.0
        %619 = vmatprep.subr.mxu0 0.0
        %620 = vmatpush1.msra.mxu0 0.0
        %621 = vmatprep.subr.mxu0 0.0
        %622 = vmatpush1.msra.mxu0 0.0
        %623 = vmatprep.subr.mxu0 0.0
        %624 = vmatpush1.msra.mxu0 0.0
        %625 = vmatprep.subr.mxu0 0.0
        %626 = vmatpush1.msra.mxu0 0.0
        %627 = vmatprep.subr.mxu0 0.0
        %628 = vmatpush1.msra.mxu0 0.0
        %629 = vmatprep.subr.mxu0 0.0
        %630 = vmatpush1.msra.mxu0 0.0
        %631 = vmatprep.subr.mxu0 0.0
        %632 = vmatpush1.msra.mxu0 0.0
        %633 = vmatprep.subr.mxu0 0.0
        %634 = vmatpush1.msra.mxu0 0.0
        %635 = vmatprep.subr.mxu0 0.0
        %636 = vmatpush1.msra.mxu0 0.0
        %637 = vmatprep.subr.mxu0 0.0
        %638 = vmatpush1.msra.mxu0 0.0
        %639 = vmatprep.subr.mxu0 0.0
        %640 = vmatpush1.msra.mxu0 0.0
        %641 = vmatprep.subr.mxu0 0.0
        %642 = vmatpush1.msra.mxu0 0.0
        %643 = vmatprep.subr.mxu0 0.0
        %644 = vmatpush1.msra.mxu0 0.0
        %645 = vmatprep.subr.mxu0 0.0
        %646 = vmatpush1.msra.mxu0 0.0
        %647 = vmatprep.subr.mxu0 0.0
        %648 = vmatpush1.msra.mxu0 0.0
        %649 = vmatprep.subr.mxu0 0.0
        %650 = vmatpush1.msra.mxu0 0.0
        %651 = vmatprep.subr.mxu0 0.0
        %652 = vmatpush1.msra.mxu0 0.0
        %653 = vmatprep.subr.mxu0 0.0
        %654 = vmatpush1.msra.mxu0 0.0
        %655 = vmatprep.subr.mxu0 0.0
        %656 = vmatpush1.msra.mxu0 0.0
        %657 = vmatprep.subr.mxu0 0.0
        %658 = vmatpush1.msra.mxu0 0.0
        %659 = vmatprep.subr.mxu0 0.0
        %660 = vmatpush1.msra.mxu0 0.0
        %661 = vmatprep.subr.mxu0 0.0
        %662 = vmatpush1.msra.mxu0 0.0
        %663 = vmatprep.subr.mxu0 0.0
        %664 = vmatpush1.msra.mxu0 0.0
        %665 = vmatprep.subr.mxu0 0.0
        %666 = vmatpush1.msra.mxu0 0.0
        %667 = vmatprep.subr.mxu0 0.0
        %668 = vmatpush1.msra.mxu0 0.0
        %669 = vmatprep.subr.mxu0 0.0
        %670 = vmatpush1.msra.mxu0 0.0
        %671 = vmatprep.subr.mxu0 0.0
        %672 = vmatpush1.msra.mxu0 0.0
        %673 = vmatprep.mubr.f32.mxu0 0.0
        %674 = vmatmul.mubr.f32.gmra.mrb[0].mxu0 %v607
        %v675 = vpop.f32.mrb[0].mxu0
        %v676 = vadd.f32 0.0, %v675
        %v677 = vpop.f32.mrb[0].mxu0
        %678 = vdwg.mxu0
        %v679 = vadd.f32 %v606, %v676
        %v680 = vxor.u32 %v679, 2147483648
        %v681 = vmul.f32 %v680, 1.442695
        %v682 = vpow.pop %v681
        %v683 = vadd.f32 %v682, 1.0
        %v684 = vrcp.pop %v683
        %v685 = vmul.f32 1.0, %v684
        %v686 = vadd.f32 %v676, %v360
        %688 = vrot.lane.b32.xlu0 %v686, 64
        %v689 = vpop.permute.xlu0 %688
        %v691 = vmul.f32 %v685, %v689
        %693 = vrot.lane.b32.xlu0 %v691, 64
        %v694 = vpop.permute.xlu0 %693
        %v696 = vadd.f32 %v606, %v694
        %v697 = vtanh.pop %v696
        %v698 = vsub.f32 1.0, %v685
        %700 = vrot.lane.b32.xlu0 %v697, 96
        %v701 = vpop.permute.xlu0 %700
        %v703 = vmul.f32 %v698, %v701
        %v704 = vmul.f32 %v685, %v598
        %v705 = vadd.f32 %v703, %v704
        %707 = vrot.lane.b32.xlu0 %v705, 96
        %v708 = vpop.permute.xlu0 %707
        %s710 = scalar_lea.vmem %s254, 6 [#allocation8]
        %711 = vst.msk [vmem:[%s710] sm:$0x3] %vm389, %v708
        %712 = vst.msk [vmem:[#allocation2] sm:$0x3] %vm389, %v708
        %713 = vst.msk [vmem:[#allocation9] sm:$0x3] %vm389, %v708
        %s714 = sand.u32 %s122, 1
        %s715 = scalar_lea.sflag [#allocation5], %s714
        %s716 = sand.u32 %s122, 1
        %s717 = smul.addr %s716, 8
        %s718 = scalar_lea.vmem [#allocation8], %s717
        // Predicated region
        $region49: #{tpu_custom_call.1} parent=35 // pred_check
          %p719 = pneg %p132
        $region50: #{tpu_custom_call.1} parent=35 // pred_check_branch
          %721 = sbr.rel (%p719) target = $region52
        $region51: #{tpu_custom_call.1} parent=35 // pred_region
          %s722 = smul.u32 4, %s25
          %s724 = ssub.s32 128, 128
          %725 = vsyncadd %s715, %s724
          %s726 = smul.addr %s722, 32
          %s727 = scalar_lea.hbm %s4, %s726
          %s728 = sshll.u32 %s718, 4
          %s729 = int_to_ptr.vmem [resolvable:$true] %s728
          %734 = dma.vmem_to_hbm [thread:$0]  %s729, 128, %s727, %s715, 32, 32, 2
        $region52: #{tpu_custom_call.1} parent=35 // pred_fallthru
          _
        // Predicated region
        $region53: #{tpu_custom_call.1} parent=35 // pred_check
          %p735 = pneg %p153
        $region54: #{tpu_custom_call.1} parent=35 // pred_check_branch
          %737 = sbr.rel (%p735) target = $region56
        $region55: #{tpu_custom_call.1} parent=35 // pred_region
          %s739 = ssub.s32 32, 32
          %740 = vsyncadd [#allocation10], %s739
          %s742 = sshll.u32 [#allocation9], 4
          %s743 = int_to_ptr.vmem [resolvable:$true] %s742
          %745 = dma.vmem_to_hbm [thread:$0]  %s743, 32, %s5, [#allocation10]
        $region56: #{tpu_custom_call.1} parent=35 // pred_fallthru
          _
        // Predicated region
        $region57: #{tpu_custom_call.1} parent=35 // pred_check
          %p746 = pneg %p153
        $region58: #{tpu_custom_call.1} parent=35 // pred_check_branch
          %748 = sbr.rel (%p746) target = $region60
        $region59: #{tpu_custom_call.1} parent=35 // pred_region
          %749 = dma.done [#allocation10], 32
        $region60: #{tpu_custom_call.1} parent=35 // pred_fallthru
          _
      $region36: #{tpu_custom_call.1} parent=5 // pred_fallthru
        _
      %p750 = scmp.le.s32.totalorder 2, %s20
      // Predicated region
      $region61: #{tpu_custom_call.1} parent=5 // pred_check
        %p751 = pneg %p750
      $region62: #{tpu_custom_call.1} parent=5 // pred_check_branch
        %753 = sbr.rel (%p751) target = $region64
      $region63: #{tpu_custom_call.1} parent=5 // pred_region
        %s754 = ssub.s32 %s20, 2
        // Predicated region
        $region65: #{tpu_custom_call.1} parent=63 // pred_check
          %p755 = pneg %p138
        $region66: #{tpu_custom_call.1} parent=63 // pred_check_branch
          %757 = sbr.rel (%p755) target = $region68
        $region67: #{tpu_custom_call.1} parent=63 // pred_region
          %s758 = sand.u32 %s123, 1
          %s759 = scalar_lea.sflag [#allocation5], %s758
          %s760 = sand.u32 %s123, 1
          %s761 = smul.addr %s760, 8
          %s762 = scalar_lea.vmem [#allocation8], %s761
          %763 = dma.done %s759, 128
        $region68: #{tpu_custom_call.1} parent=63 // pred_fallthru
          _
      $region64: #{tpu_custom_call.1} parent=5 // pred_fallthru
        _
    $region6: #{tpu_custom_call.1} parent=1 // loop_footer
      %s24 = sadd.s32 1, %s20
    $region7: #{tpu_custom_call.1} parent=1 // loop_footer_branch
      %19 = sbr.rel target = $region3
    $region8: #{tpu_custom_call.1} parent=1 // loop_exit
      _
    %764 = vsyncpa [#allocation4], 1
    %s765 = scalar_lea.sflag [#allocation4], 1
    %766 = vsyncpa %s765, 1
    %767 = vsyncpa [#allocation7], 1
    %768 = vsyncpa [#allocation5], 1
    %s769 = scalar_lea.sflag [#allocation5], 1
    %770 = vsyncpa %s769, 1
    %771 = vsyncpa [#allocation10], 1

</llo_original>
